<compile_context>
chip_gen: v7x
topology: tpu7x:2x2x1
jax: 0.10.0
libtpu: 0.0.40
codegen_flags: <defaults>
</compile_context>

<pallas_src>
import functools

import jax
import jax.numpy as jnp
from jax import lax
from jax.experimental import pallas as pl
from jax.experimental.pallas import tpu as pltpu

LANES = 128  # pad every feature dim to one full lane width


def sdss_mlp_kernel(x_ref, w_ref, b_ref, o_ref, *, num_classes):
    # x_ref: (B, 128)   w_ref: (3, 128, 128)   b_ref: (3, 128)   o_ref: (B, 128)

    # fc1 + ReLU
    h = jnp.dot(x_ref[...], w_ref[0], preferred_element_type=jnp.float32)
    h = jnp.maximum(h + b_ref[0:1, :], 0.0)

    # fc2 + ReLU
    h = jnp.dot(h, w_ref[1], preferred_element_type=jnp.float32)
    h = jnp.maximum(h + b_ref[1:2, :], 0.0)

    # fc3
    logits = jnp.dot(h, w_ref[2], preferred_element_type=jnp.float32)
    logits = logits + b_ref[2:3, :]

    # Mask padded class lanes with a large finite negative value (no inf/NaN
    # hazards), then softmax along the class (last) axis.
    lane = lax.broadcasted_iota(jnp.int32, logits.shape, dimension=1)
    valid = lane < num_classes
    logits = jnp.where(valid, logits, jnp.float32(-1e30))

    m = jnp.max(logits, axis=-1, keepdims=True)
    e = jnp.exp(logits - m)
    e = jnp.where(valid, e, 0.0)          # exact zeros in padded lanes
    denom = jnp.sum(e, axis=-1, keepdims=True)
    o_ref[...] = (e / denom).astype(o_ref.dtype)   # exact divide -> rows sum to 1


def sdss_classifier_forward(x, w1, b1, w2, b2, w3, b3):
    """x: (B, input_size); w_i: (in, out); b_i: (1, out). Returns (B, num_classes)."""
    B, in_dim = x.shape
    H = w1.shape[1]
    C = w3.shape[1]
    assert in_dim <= LANES and H <= LANES and C <= LANES

    # --- pack / pad operands (3 input DMAs instead of 7) -------------------
    xp = jnp.zeros((B, LANES), jnp.float32).at[:, :in_dim].set(x)

    wp = jnp.zeros((3, LANES, LANES), jnp.float32)
    wp = wp.at[0, :in_dim, :H].set(w1)
    wp = wp.at[1, :H, :H].set(w2)
    wp = wp.at[2, :H, :C].set(w3)

    bp = jnp.zeros((3, LANES), jnp.float32)
    bp = bp.at[0, :H].set(b1.reshape(-1))
    bp = bp.at[1, :H].set(b2.reshape(-1))
    bp = bp.at[2, :C].set(b3.reshape(-1))

    vmem_spec = pl.BlockSpec(memory_space=pltpu.MemorySpace.VMEM)
    cost = pl.CostEstimate(
        flops=2 * B * LANES * LANES * 3,          # three 128x128 matmuls
        transcendentals=B * LANES,                # exp in softmax
        bytes_accessed=4 * (B * LANES             # x
                            + 3 * LANES * LANES   # packed weights
                            + 3 * LANES           # packed biases
                            + B * LANES),         # output
    )

    out_padded = pl.pallas_call(
        functools.partial(sdss_mlp_kernel, num_classes=C),
        out_shape=jax.ShapeDtypeStruct((B, LANES), jnp.float32),
        in_specs=[vmem_spec, vmem_spec, vmem_spec],
        out_specs=vmem_spec,
        cost_estimate=cost,
    )(xp, wp, bp)

    return out_padded[:, :C]


def reference_forward(x, w1, b1, w2, b2, w3, b3):
    h = jnp.maximum(x @ w1 + b1, 0.0)
    h = jnp.maximum(h @ w2 + b2, 0.0)
    logits = h @ w3 + b3
    return jax.nn.softmax(logits, axis=1)


if __name__ == "__main__":
    # Shapes implied by the module: flat feature vectors.
    batch = 8
    input_size = 16
    hidden_size = 32
    num_classes = 4

    key = jax.random.PRNGKey(0)
    ks = jax.random.split(key, 7)

    x = jax.random.normal(ks[0], (batch, input_size), dtype=jnp.float32)

    # Deterministic parameter init (synthetic; nn.Linear-like scale).
    def init_linear(kw, kb, fan_in, fan_out):
        bound = 1.0 / jnp.sqrt(jnp.float32(fan_in))
        w = jax.random.uniform(kw, (fan_in, fan_out), jnp.float32, -bound, bound)
        b = jax.random.uniform(kb, (1, fan_out), jnp.float32, -bound, bound)
        return w, b

    w1, b1 = init_linear(ks[1], ks[2], input_size, hidden_size)
    w2, b2 = init_linear(ks[3], ks[4], hidden_size, hidden_size)
    w3, b3 = init_linear(ks[5], ks[6], hidden_size, num_classes)

    out = sdss_classifier_forward(x, w1, b1, w2, b2, w3, b3)
    out = jax.block_until_ready(out)

    ref = reference_forward(x, w1, b1, w2, b2, w3, b3)
    assert out.shape == (batch, num_classes)
    assert jnp.allclose(out, ref, atol=1e-5, rtol=1e-5), "mismatch vs reference"
    assert jnp.allclose(jnp.sum(out, axis=1), 1.0, atol=1e-5), "softmax rows must sum to 1"

    print("KERNEL_OK")
</pallas_src>

<mosaic_0001>
module attributes {stable_mosaic.version = 11 : i64} {
  func.func @sdss_mlp_kernel(%arg0: memref<8x128xf32, #tpu.memory_space<vmem>>, %arg1: memref<3x128x128xf32, #tpu.memory_space<vmem>>, %arg2: memref<3x128xf32, #tpu.memory_space<vmem>>, %arg3: memref<8x128xf32, #tpu.memory_space<vmem>>) attributes {dimension_semantics = [], scalar_prefetch = 0 : i64, scratch_operands = 0 : i64, tpu.core_type = #tpu.core_type<tc>} {
    %c0 = arith.constant 0 : index
    %c0_0 = arith.constant 0 : index
    %0 = vector.load %arg0[%c0, %c0_0] : memref<8x128xf32, #tpu.memory_space<vmem>>, vector<8x128xf32>
    %c0_1 = arith.constant 0 : index
    %c0_2 = arith.constant 0 : index
    %c0_3 = arith.constant 0 : index
    %1 = vector.load %arg1[%c0_1, %c0_2, %c0_3] : memref<3x128x128xf32, #tpu.memory_space<vmem>>, vector<1x128x128xf32>
    %2 = vector.shape_cast %1 : vector<1x128x128xf32> to vector<128x128xf32>
    %cst = arith.constant dense<0.000000e+00> : vector<8x128xf32>
    %3 = tpu.matmul %0, %2, %cst {dimension_numbers = #tpu.dot_dimension_numbers<[1], [0], [0], [1], [0, 0, 1, 1], [], []>} : vector<8x128xf32>, vector<128x128xf32>, vector<8x128xf32> -> vector<8x128xf32>
    %c0_4 = arith.constant 0 : index
    %c0_5 = arith.constant 0 : index
    %4 = vector.load %arg2[%c0_4, %c0_5] : memref<3x128xf32, #tpu.memory_space<vmem>>, vector<1x128xf32>
    %5 = vector.broadcast %4 : vector<1x128xf32> to vector<8x128xf32>
    %6 = arith.addf %3, %5 : vector<8x128xf32>
    %cst_6 = arith.constant 0.000000e+00 : f32
    %7 = vector.broadcast %cst_6 : f32 to vector<8x128xf32>
    %8 = arith.maximumf %6, %7 : vector<8x128xf32>
    %c1 = arith.constant 1 : index
    %c0_7 = arith.constant 0 : index
    %c0_8 = arith.constant 0 : index
    %9 = vector.load %arg1[%c1, %c0_7, %c0_8] : memref<3x128x128xf32, #tpu.memory_space<vmem>>, vector<1x128x128xf32>
    %10 = vector.shape_cast %9 : vector<1x128x128xf32> to vector<128x128xf32>
    %cst_9 = arith.constant dense<0.000000e+00> : vector<8x128xf32>
    %11 = tpu.matmul %8, %10, %cst_9 {dimension_numbers = #tpu.dot_dimension_numbers<[1], [0], [0], [1], [0, 0, 1, 1], [], []>} : vector<8x128xf32>, vector<128x128xf32>, vector<8x128xf32> -> vector<8x128xf32>
    %c1_10 = arith.constant 1 : index
    %c0_11 = arith.constant 0 : index
    %12 = vector.load %arg2[%c1_10, %c0_11] : memref<3x128xf32, #tpu.memory_space<vmem>>, vector<1x128xf32>
    %13 = vector.broadcast %12 : vector<1x128xf32> to vector<8x128xf32>
    %14 = arith.addf %11, %13 : vector<8x128xf32>
    %cst_12 = arith.constant 0.000000e+00 : f32
    %15 = vector.broadcast %cst_12 : f32 to vector<8x128xf32>
    %16 = arith.maximumf %14, %15 : vector<8x128xf32>
    %c2 = arith.constant 2 : index
    %c0_13 = arith.constant 0 : index
    %c0_14 = arith.constant 0 : index
    %17 = vector.load %arg1[%c2, %c0_13, %c0_14] : memref<3x128x128xf32, #tpu.memory_space<vmem>>, vector<1x128x128xf32>
    %18 = vector.shape_cast %17 : vector<1x128x128xf32> to vector<128x128xf32>
    %cst_15 = arith.constant dense<0.000000e+00> : vector<8x128xf32>
    %19 = tpu.matmul %16, %18, %cst_15 {dimension_numbers = #tpu.dot_dimension_numbers<[1], [0], [0], [1], [0, 0, 1, 1], [], []>} : vector<8x128xf32>, vector<128x128xf32>, vector<8x128xf32> -> vector<8x128xf32>
    %c2_16 = arith.constant 2 : index
    %c0_17 = arith.constant 0 : index
    %20 = vector.load %arg2[%c2_16, %c0_17] : memref<3x128xf32, #tpu.memory_space<vmem>>, vector<1x128xf32>
    %21 = vector.broadcast %20 : vector<1x128xf32> to vector<8x128xf32>
    %22 = arith.addf %19, %21 : vector<8x128xf32>
    %23 = tpu.iota {dimensions = array<i32: 1>} : vector<8x128xi32>
    %c4_i32 = arith.constant 4 : i32
    %24 = vector.broadcast %c4_i32 : i32 to vector<8x128xi32>
    %25 = arith.cmpi slt, %23, %24 : vector<8x128xi32>
    %cst_18 = arith.constant -1.000000e+30 : f32
    %26 = vector.broadcast %cst_18 : f32 to vector<8x128xf32>
    %27 = arith.select %25, %22, %26 : vector<8x128xi1>, vector<8x128xf32>
    %cst_19 = arith.constant dense<0xFF800000> : vector<8xf32>
    %28 = vector.multi_reduction <maximumf>, %27, %cst_19 [1] : vector<8x128xf32> to vector<8xf32>
    %29 = vector.shape_cast %28 : vector<8xf32> to vector<8x1xf32>
    %30 = vector.broadcast %29 : vector<8x1xf32> to vector<8x128xf32>
    %31 = arith.subf %27, %30 : vector<8x128xf32>
    %32 = math.exp %31 : vector<8x128xf32>
    %cst_20 = arith.constant 0.000000e+00 : f32
    %33 = vector.broadcast %cst_20 : f32 to vector<8x128xf32>
    %34 = arith.select %25, %32, %33 : vector<8x128xi1>, vector<8x128xf32>
    %cst_21 = arith.constant dense<0.000000e+00> : vector<8xf32>
    %35 = vector.multi_reduction <add>, %34, %cst_21 [1] : vector<8x128xf32> to vector<8xf32>
    %36 = vector.shape_cast %35 : vector<8xf32> to vector<8x1xf32>
    %37 = vector.broadcast %36 : vector<8x1xf32> to vector<8x128xf32>
    %38 = arith.divf %34, %37 : vector<8x128xf32>
    %c0_22 = arith.constant 0 : index
    %c0_23 = arith.constant 0 : index
    %39 = vector.load %arg3[%c0_22, %c0_23] : memref<8x128xf32, #tpu.memory_space<vmem>>, vector<8x128xf32>
    tpu.vector_store %arg3[%c0_22, %c0_23], %38 {strides = array<i32>} : memref<8x128xf32, #tpu.memory_space<vmem>>, vector<8x128xf32>,
    return
  }
}

</mosaic_0001>

<llo_original>
// kernel: tpu_custom_call.1
$region0: #{tpu_custom_call.1}
  #allocation0 [shape = 'u32[]', space=smem, size = 0x4, offset = 0x4, fixed_abs, tag = 'smem constant byte address 0x4 - core index']
  #allocation1 [shape = 'u32[144,128]{1,0:T(1,128)}', space=vmem, size = 0x12000, scoped, tag = 'internal scratch']
  %s0 = inlined_call_operand.hbm [shape: f32[8,128], index: 0, kind: input, shape index: {}]
  %s1 = inlined_call_operand.hbm [shape: f32[3,128,128], index: 1, kind: input, shape index: {}]
  %s2 = inlined_call_operand.vmem [shape: f32[3,128], index: 2, kind: input, shape index: {}]
  %s3 = inlined_call_operand.hbm [shape: f32[8,128], index: 3, kind: output, shape index: {}]
  %s4 = sld [smem:[#allocation0]]
  $region30: #{tpu_custom_call.1} parent=0
    _
  %s6 = ssub.s32 1, %s4
  %s7 = scalar_select 0, %s6, %s4
  $region1: #{tpu_custom_call.1} parent=0
    #allocation2 [shape = 'u8[4096]{0}', space=vmem, size = 0x1000, scoped, tag = 'input window, operand 0, single buffered']
    #allocation3 [shape = 's32[1]{0}', space=sflag, size = 0x4, scoped, tag = 'scoped memory for tpu_custom_call.1']
    #allocation4 [shape = 's32[1]{0}', space=sflag, size = 0x4, scoped, tag = 'scoped memory for tpu_custom_call.1']
    #allocation5 [shape = 'u8[196608]{0}', space=vmem, size = 0x30000, scoped, tag = 'input window, operand 1, single buffered']
    #allocation6 [shape = 's32[1]{0}', space=sflag, size = 0x4, scoped, tag = 'scoped memory for tpu_custom_call.1']
    #allocation7 [shape = 'u8[4096]{0}', space=vmem, size = 0x1000, scoped, tag = 'output window, operand 0, single buffered']
    %8 = vsyncpa [#allocation3], 0
    %9 = vsyncpa [#allocation6], 0
    %10 = vsyncpa [#allocation4], 0
    // Predicated region
    $region2: #{tpu_custom_call.1} parent=1 // pred_check
      _
    $region3: #{tpu_custom_call.1} parent=1 // pred_check_branch
      %12 = sbr.rel (0) target = $region5
    $region4: #{tpu_custom_call.1} parent=1 // pred_region
      %s14 = ssub.s32 128, 128
      %15 = vsyncadd [#allocation3], %s14
      %s17 = sshll.u32 [#allocation2], 4
      %s18 = int_to_ptr.vmem [resolvable:$true] %s17
      %20 = dma.hbm_to_vmem [thread:$0]  %s0, 128, %s18, [#allocation3]
    $region5: #{tpu_custom_call.1} parent=1 // pred_fallthru
      _
    // Predicated region
    $region6: #{tpu_custom_call.1} parent=1 // pred_check
      _
    $region7: #{tpu_custom_call.1} parent=1 // pred_check_branch
      %22 = sbr.rel (0) target = $region9
    $region8: #{tpu_custom_call.1} parent=1 // pred_region
      %s24 = ssub.s32 6144, 6144
      %25 = vsyncadd [#allocation6], %s24
      %s26 = sshll.u32 [#allocation5], 4
      %s27 = int_to_ptr.vmem [resolvable:$true] %s26
      %32 = dma.hbm_to_vmem [thread:$0]  %s1, 6144, %s27, [#allocation6], 128, 128, 8
    $region9: #{tpu_custom_call.1} parent=1 // pred_fallthru
      _
    // Predicated region
    $region10: #{tpu_custom_call.1} parent=1 // pred_check
      _
    $region11: #{tpu_custom_call.1} parent=1 // pred_check_branch
      %34 = sbr.rel (0) target = $region13
    $region12: #{tpu_custom_call.1} parent=1 // pred_region
      _
    $region13: #{tpu_custom_call.1} parent=1 // pred_fallthru
      _
    // Predicated region
    $region14: #{tpu_custom_call.1} parent=1 // pred_check
      _
    $region15: #{tpu_custom_call.1} parent=1 // pred_check_branch
      %36 = sbr.rel (0) target = $region17
    $region16: #{tpu_custom_call.1} parent=1 // pred_region
      %37 = dma.done [#allocation3], 128
    $region17: #{tpu_custom_call.1} parent=1 // pred_fallthru
      _
    // Predicated region
    $region18: #{tpu_custom_call.1} parent=1 // pred_check
      _
    $region19: #{tpu_custom_call.1} parent=1 // pred_check_branch
      %39 = sbr.rel (0) target = $region21
    $region20: #{tpu_custom_call.1} parent=1 // pred_region
      %40 = dma.done [#allocation6], 6144
    $region21: #{tpu_custom_call.1} parent=1 // pred_fallthru
      _
    %v41 = vld [vmem:[#allocation2] sm:$0xff]
    %v42 = vld [vmem:[#allocation5] sm:$0xff]
    %v43 = vld [vmem:[#allocation5 + $0x8] sm:$0xff]
    %v44 = vld [vmem:[#allocation5 + $0x10] sm:$0xff]
    %v45 = vld [vmem:[#allocation5 + $0x18] sm:$0xff]
    %v46 = vld [vmem:[#allocation5 + $0x20] sm:$0xff]
    %v47 = vld [vmem:[#allocation5 + $0x28] sm:$0xff]
    %v48 = vld [vmem:[#allocation5 + $0x30] sm:$0xff]
    %v49 = vld [vmem:[#allocation5 + $0x38] sm:$0xff]
    %v50 = vld [vmem:[#allocation5 + $0x40] sm:$0xff]
    %v51 = vld [vmem:[#allocation5 + $0x48] sm:$0xff]
    %v52 = vld [vmem:[#allocation5 + $0x50] sm:$0xff]
    %v53 = vld [vmem:[#allocation5 + $0x58] sm:$0xff]
    %v54 = vld [vmem:[#allocation5 + $0x60] sm:$0xff]
    %v55 = vld [vmem:[#allocation5 + $0x68] sm:$0xff]
    %v56 = vld [vmem:[#allocation5 + $0x70] sm:$0xff]
    %v57 = vld [vmem:[#allocation5 + $0x78] sm:$0xff]
    %v58 = vld [vmem:[%s2] sm:$0x1]
    %v59 = vlaneseq
    %v60 = vshrl.u32 %v59, 7
    %v61 = vsub.s32 0, %v60
    %v62 = vrot.slane %v58, %v61
    %63 = vmatprep.subr.mxu0 0.0
    %64 = vmatpush1.msra.mxu0 %v42
    %65 = vmatprep.subr.mxu0 0.0
    %66 = vmatpush1.msra.mxu0 %v43
    %67 = vmatprep.subr.mxu0 0.0
    %68 = vmatpush1.msra.mxu0 %v44
    %69 = vmatprep.subr.mxu0 0.0
    %70 = vmatpush1.msra.mxu0 %v45
    %71 = vmatprep.subr.mxu0 0.0
    %72 = vmatpush1.msra.mxu0 %v46
    %73 = vmatprep.subr.mxu0 0.0
    %74 = vmatpush1.msra.mxu0 %v47
    %75 = vmatprep.subr.mxu0 0.0
    %76 = vmatpush1.msra.mxu0 %v48
    %77 = vmatprep.subr.mxu0 0.0
    %78 = vmatpush1.msra.mxu0 %v49
    %79 = vmatprep.subr.mxu0 0.0
    %80 = vmatpush1.msra.mxu0 %v50
    %81 = vmatprep.subr.mxu0 0.0
    %82 = vmatpush1.msra.mxu0 %v51
    %83 = vmatprep.subr.mxu0 0.0
    %84 = vmatpush1.msra.mxu0 %v52
    %85 = vmatprep.subr.mxu0 0.0
    %86 = vmatpush1.msra.mxu0 %v53
    %87 = vmatprep.subr.mxu0 0.0
    %88 = vmatpush1.msra.mxu0 %v54
    %89 = vmatprep.subr.mxu0 0.0
    %90 = vmatpush1.msra.mxu0 %v55
    %91 = vmatprep.subr.mxu0 0.0
    %92 = vmatpush1.msra.mxu0 %v56
    %93 = vmatprep.subr.mxu0 0.0
    %94 = vmatpush1.msra.mxu0 %v57
    %95 = vmatprep.subr.mxu0 0.0
    %96 = vmatpush1.msra.mxu0 0.0
    %97 = vmatprep.subr.mxu0 0.0
    %98 = vmatpush1.msra.mxu0 0.0
    %99 = vmatprep.subr.mxu0 0.0
    %100 = vmatpush1.msra.mxu0 0.0
    %101 = vmatprep.subr.mxu0 0.0
    %102 = vmatpush1.msra.mxu0 0.0
    %103 = vmatprep.subr.mxu0 0.0
    %104 = vmatpush1.msra.mxu0 0.0
    %105 = vmatprep.subr.mxu0 0.0
    %106 = vmatpush1.msra.mxu0 0.0
    %107 = vmatprep.subr.mxu0 0.0
    %108 = vmatpush1.msra.mxu0 0.0
    %109 = vmatprep.subr.mxu0 0.0
    %110 = vmatpush1.msra.mxu0 0.0
    %111 = vmatprep.subr.mxu0 0.0
    %112 = vmatpush1.msra.mxu0 0.0
    %113 = vmatprep.subr.mxu0 0.0
    %114 = vmatpush1.msra.mxu0 0.0
    %115 = vmatprep.subr.mxu0 0.0
    %116 = vmatpush1.msra.mxu0 0.0
    %117 = vmatprep.subr.mxu0 0.0
    %118 = vmatpush1.msra.mxu0 0.0
    %119 = vmatprep.subr.mxu0 0.0
    %120 = vmatpush1.msra.mxu0 0.0
    %121 = vmatprep.subr.mxu0 0.0
    %122 = vmatpush1.msra.mxu0 0.0
    %123 = vmatprep.subr.mxu0 0.0
    %124 = vmatpush1.msra.mxu0 0.0
    %125 = vmatprep.subr.mxu0 0.0
    %126 = vmatpush1.msra.mxu0 0.0
    %127 = vmatprep.mubr.f32.mxu0 0.0
    %128 = vmatmul.mubr.f32.gmra.mrb[0].mxu0 %v41
    %v129 = vpop.f32.mrb[0].mxu0
    %v130 = vadd.f32 %v62, %v129
    %v131 = vpop.f32.mrb[0].mxu0
    %132 = vdwg.mxu0
    %v133 = vmax.f32 %v130, 0.0
    %s134 = scalar_lea.vmem [#allocation5], 128
    %v135 = vld [vmem:[%s134] sm:$0xff]
    %v136 = vld [vmem:[%s134 + $0x8] sm:$0xff]
    %v137 = vld [vmem:[%s134 + $0x10] sm:$0xff]
    %v138 = vld [vmem:[%s134 + $0x18] sm:$0xff]
    %v139 = vld [vmem:[%s134 + $0x20] sm:$0xff]
    %v140 = vld [vmem:[%s134 + $0x28] sm:$0xff]
    %v141 = vld [vmem:[%s134 + $0x30] sm:$0xff]
    %v142 = vld [vmem:[%s134 + $0x38] sm:$0xff]
    %v143 = vld [vmem:[%s134 + $0x40] sm:$0xff]
    %v144 = vld [vmem:[%s134 + $0x48] sm:$0xff]
    %v145 = vld [vmem:[%s134 + $0x50] sm:$0xff]
    %v146 = vld [vmem:[%s134 + $0x58] sm:$0xff]
    %v147 = vld [vmem:[%s134 + $0x60] sm:$0xff]
    %v148 = vld [vmem:[%s134 + $0x68] sm:$0xff]
    %v149 = vld [vmem:[%s134 + $0x70] sm:$0xff]
    %v150 = vld [vmem:[%s134 + $0x78] sm:$0xff]
    %v151 = vld [vmem:[%s2 + $0x1] sm:$0x1]
    %v152 = vlaneseq
    %v153 = vshrl.u32 %v152, 7
    %v154 = vsub.s32 0, %v153
    %v155 = vrot.slane %v151, %v154
    %156 = vmatprep.subr.mxu0 0.0
    %157 = vmatpush1.msra.mxu0 %v135
    %158 = vmatprep.subr.mxu0 0.0
    %159 = vmatpush1.msra.mxu0 %v136
    %160 = vmatprep.subr.mxu0 0.0
    %161 = vmatpush1.msra.mxu0 %v137
    %162 = vmatprep.subr.mxu0 0.0
    %163 = vmatpush1.msra.mxu0 %v138
    %164 = vmatprep.subr.mxu0 0.0
    %165 = vmatpush1.msra.mxu0 %v139
    %166 = vmatprep.subr.mxu0 0.0
    %167 = vmatpush1.msra.mxu0 %v140
    %168 = vmatprep.subr.mxu0 0.0
    %169 = vmatpush1.msra.mxu0 %v141
    %170 = vmatprep.subr.mxu0 0.0
    %171 = vmatpush1.msra.mxu0 %v142
    %172 = vmatprep.subr.mxu0 0.0
    %173 = vmatpush1.msra.mxu0 %v143
    %174 = vmatprep.subr.mxu0 0.0
    %175 = vmatpush1.msra.mxu0 %v144
    %176 = vmatprep.subr.mxu0 0.0
    %177 = vmatpush1.msra.mxu0 %v145
    %178 = vmatprep.subr.mxu0 0.0
    %179 = vmatpush1.msra.mxu0 %v146
    %180 = vmatprep.subr.mxu0 0.0
    %181 = vmatpush1.msra.mxu0 %v147
    %182 = vmatprep.subr.mxu0 0.0
    %183 = vmatpush1.msra.mxu0 %v148
    %184 = vmatprep.subr.mxu0 0.0
    %185 = vmatpush1.msra.mxu0 %v149
    %186 = vmatprep.subr.mxu0 0.0
    %187 = vmatpush1.msra.mxu0 %v150
    %188 = vmatprep.subr.mxu0 0.0
    %189 = vmatpush1.msra.mxu0 0.0
    %190 = vmatprep.subr.mxu0 0.0
    %191 = vmatpush1.msra.mxu0 0.0
    %192 = vmatprep.subr.mxu0 0.0
    %193 = vmatpush1.msra.mxu0 0.0
    %194 = vmatprep.subr.mxu0 0.0
    %195 = vmatpush1.msra.mxu0 0.0
    %196 = vmatprep.subr.mxu0 0.0
    %197 = vmatpush1.msra.mxu0 0.0
    %198 = vmatprep.subr.mxu0 0.0
    %199 = vmatpush1.msra.mxu0 0.0
    %200 = vmatprep.subr.mxu0 0.0
    %201 = vmatpush1.msra.mxu0 0.0
    %202 = vmatprep.subr.mxu0 0.0
    %203 = vmatpush1.msra.mxu0 0.0
    %204 = vmatprep.subr.mxu0 0.0
    %205 = vmatpush1.msra.mxu0 0.0
    %206 = vmatprep.subr.mxu0 0.0
    %207 = vmatpush1.msra.mxu0 0.0
    %208 = vmatprep.subr.mxu0 0.0
    %209 = vmatpush1.msra.mxu0 0.0
    %210 = vmatprep.subr.mxu0 0.0
    %211 = vmatpush1.msra.mxu0 0.0
    %212 = vmatprep.subr.mxu0 0.0
    %213 = vmatpush1.msra.mxu0 0.0
    %214 = vmatprep.subr.mxu0 0.0
    %215 = vmatpush1.msra.mxu0 0.0
    %216 = vmatprep.subr.mxu0 0.0
    %217 = vmatpush1.msra.mxu0 0.0
    %218 = vmatprep.subr.mxu0 0.0
    %219 = vmatpush1.msra.mxu0 0.0
    %220 = vmatprep.mubr.f32.mxu0 0.0
    %221 = vmatmul.mubr.f32.gmra.mrb[0].mxu0 %v133
    %v222 = vpop.f32.mrb[0].mxu0
    %v223 = vadd.f32 %v155, %v222
    %v224 = vpop.f32.mrb[0].mxu0
    %225 = vdwg.mxu0
    %v226 = vmax.f32 %v223, 0.0
    %s227 = scalar_lea.vmem [#allocation5], 256
    %v228 = vld [vmem:[%s227] sm:$0xff]
    %v229 = vld [vmem:[%s227 + $0x8] sm:$0xff]
    %v230 = vld [vmem:[%s227 + $0x10] sm:$0xff]
    %v231 = vld [vmem:[%s227 + $0x18] sm:$0xff]
    %v232 = vld [vmem:[%s227 + $0x20] sm:$0xff]
    %v233 = vld [vmem:[%s227 + $0x28] sm:$0xff]
    %v234 = vld [vmem:[%s227 + $0x30] sm:$0xff]
    %v235 = vld [vmem:[%s227 + $0x38] sm:$0xff]
    %v236 = vld [vmem:[%s227 + $0x40] sm:$0xff]
    %v237 = vld [vmem:[%s227 + $0x48] sm:$0xff]
    %v238 = vld [vmem:[%s227 + $0x50] sm:$0xff]
    %v239 = vld [vmem:[%s227 + $0x58] sm:$0xff]
    %v240 = vld [vmem:[%s227 + $0x60] sm:$0xff]
    %v241 = vld [vmem:[%s227 + $0x68] sm:$0xff]
    %v242 = vld [vmem:[%s227 + $0x70] sm:$0xff]
    %v243 = vld [vmem:[%s227 + $0x78] sm:$0xff]
    %v244 = vld [vmem:[%s2 + $0x2] sm:$0x1]
    %v245 = vlaneseq
    %v246 = vshrl.u32 %v245, 7
    %v247 = vsub.s32 0, %v246
    %v248 = vrot.slane %v244, %v247
    %249 = vmatprep.subr.mxu0 0.0
    %250 = vmatpush1.msra.mxu0 %v228
    %251 = vmatprep.subr.mxu0 0.0
    %252 = vmatpush1.msra.mxu0 %v229
    %253 = vmatprep.subr.mxu0 0.0
    %254 = vmatpush1.msra.mxu0 %v230
    %255 = vmatprep.subr.mxu0 0.0
    %256 = vmatpush1.msra.mxu0 %v231
    %257 = vmatprep.subr.mxu0 0.0
    %258 = vmatpush1.msra.mxu0 %v232
    %259 = vmatprep.subr.mxu0 0.0
    %260 = vmatpush1.msra.mxu0 %v233
    %261 = vmatprep.subr.mxu0 0.0
    %262 = vmatpush1.msra.mxu0 %v234
    %263 = vmatprep.subr.mxu0 0.0
    %264 = vmatpush1.msra.mxu0 %v235
    %265 = vmatprep.subr.mxu0 0.0
    %266 = vmatpush1.msra.mxu0 %v236
    %267 = vmatprep.subr.mxu0 0.0
    %268 = vmatpush1.msra.mxu0 %v237
    %269 = vmatprep.subr.mxu0 0.0
    %270 = vmatpush1.msra.mxu0 %v238
    %271 = vmatprep.subr.mxu0 0.0
    %272 = vmatpush1.msra.mxu0 %v239
    %273 = vmatprep.subr.mxu0 0.0
    %274 = vmatpush1.msra.mxu0 %v240
    %275 = vmatprep.subr.mxu0 0.0
    %276 = vmatpush1.msra.mxu0 %v241
    %277 = vmatprep.subr.mxu0 0.0
    %278 = vmatpush1.msra.mxu0 %v242
    %279 = vmatprep.subr.mxu0 0.0
    %280 = vmatpush1.msra.mxu0 %v243
    %281 = vmatprep.subr.mxu0 0.0
    %282 = vmatpush1.msra.mxu0 0.0
    %283 = vmatprep.subr.mxu0 0.0
    %284 = vmatpush1.msra.mxu0 0.0
    %285 = vmatprep.subr.mxu0 0.0
    %286 = vmatpush1.msra.mxu0 0.0
    %287 = vmatprep.subr.mxu0 0.0
    %288 = vmatpush1.msra.mxu0 0.0
    %289 = vmatprep.subr.mxu0 0.0
    %290 = vmatpush1.msra.mxu0 0.0
    %291 = vmatprep.subr.mxu0 0.0
    %292 = vmatpush1.msra.mxu0 0.0
    %293 = vmatprep.subr.mxu0 0.0
    %294 = vmatpush1.msra.mxu0 0.0
    %295 = vmatprep.subr.mxu0 0.0
    %296 = vmatpush1.msra.mxu0 0.0
    %297 = vmatprep.subr.mxu0 0.0
    %298 = vmatpush1.msra.mxu0 0.0
    %299 = vmatprep.subr.mxu0 0.0
    %300 = vmatpush1.msra.mxu0 0.0
    %301 = vmatprep.subr.mxu0 0.0
    %302 = vmatpush1.msra.mxu0 0.0
    %303 = vmatprep.subr.mxu0 0.0
    %304 = vmatpush1.msra.mxu0 0.0
    %305 = vmatprep.subr.mxu0 0.0
    %306 = vmatpush1.msra.mxu0 0.0
    %307 = vmatprep.subr.mxu0 0.0
    %308 = vmatpush1.msra.mxu0 0.0
    %309 = vmatprep.subr.mxu0 0.0
    %310 = vmatpush1.msra.mxu0 0.0
    %311 = vmatprep.subr.mxu0 0.0
    %312 = vmatpush1.msra.mxu0 0.0
    %313 = vmatprep.mubr.f32.mxu0 0.0
    %314 = vmatmul.mubr.f32.gmra.mrb[0].mxu0 %v226
    %v315 = vpop.f32.mrb[0].mxu0
    %v316 = vadd.f32 %v248, %v315
    %v317 = vpop.f32.mrb[0].mxu0
    %318 = vdwg.mxu0
    %v319 = vlaneseq
    %v320 = vand.u32 %v319, 127
    %vm321 = vcmp.lt.s32.totalorder %v320, 4
    %v322 = vsel %vm321, %v316, -1e+30
    %323 = vmax.xlane.f32.xlu0 %v322
    %v324 = vpop.xlane.xlu0 %323
    %v325 = vsub.f32 %v322, %v324
    %v326 = vmul.f32 %v325, 1.442695
    %v327 = vpow.pop %v326
    %v328 = vsel %vm321, %v327, 0.0
    %329 = vadd.xlane.f32.xlu0 %v328
    %v330 = vpop.xlane.xlu0 %329
    %v331 = vrcp.pop %v330
    %v332 = vmul.f32 %v328, %v331
    %333 = vst [vmem:[#allocation7] sm:$0xff] %v332
    // Predicated region
    $region22: #{tpu_custom_call.1} parent=1 // pred_check
      _
    $region23: #{tpu_custom_call.1} parent=1 // pred_check_branch
      %335 = sbr.rel (0) target = $region25
    $region24: #{tpu_custom_call.1} parent=1 // pred_region
      %s337 = ssub.s32 128, 128
      %338 = vsyncadd [#allocation4], %s337
      %s340 = sshll.u32 [#allocation7], 4
      %s341 = int_to_ptr.vmem [resolvable:$true] %s340
      %343 = dma.vmem_to_hbm [thread:$0]  %s341, 128, %s3, [#allocation4]
    $region25: #{tpu_custom_call.1} parent=1 // pred_fallthru
      _
    // Predicated region
    $region26: #{tpu_custom_call.1} parent=1 // pred_check
      _
    $region27: #{tpu_custom_call.1} parent=1 // pred_check_branch
      %345 = sbr.rel (0) target = $region29
    $region28: #{tpu_custom_call.1} parent=1 // pred_region
      %346 = dma.done [#allocation4], 128
    $region29: #{tpu_custom_call.1} parent=1 // pred_fallthru
      _
    %347 = vsyncpa [#allocation3], 1
    %348 = vsyncpa [#allocation6], 1
    %349 = vsyncpa [#allocation4], 1

</llo_original>
